<compile_context>
chip_gen: v7x
topology: tpu7x:2x2x1
jax: 0.10.0
libtpu: 0.0.40
codegen_flags: <defaults>
</compile_context>

<pallas_src>
import functools
import math

import jax
import jax.numpy as jnp
from jax import lax
from jax.experimental import pallas as pl
from jax.experimental.pallas import tpu as pltpu


def _round_up(x, m):
    return ((x + m - 1) // m) * m


def _cdiv(a, b):
    return -(-a // b)


def _sublane_multiple(dtype):
    return {4: 8, 2: 16, 1: 32}.get(jnp.dtype(dtype).itemsize, 8)


def _choose_packing(E, max_lanes=512):
    """Lane-packing factor g so that g*E is (near) lane-dense."""
    g0 = 128 // math.gcd(E, 128)          # minimal g making g*E a multiple of 128
    if g0 * E <= max_lanes:
        return g0
    best_g, best_waste = 1, None
    for g in range(1, max(1, max_lanes // E) + 1):
        L = g * E
        waste = (_round_up(L, 128) - L) / L
        if (best_waste is None or waste < best_waste - 1e-12
                or (abs(waste - best_waste) <= 1e-12 and g > best_g)):
            best_g, best_waste = g, waste
    return best_g


def _time2vec_kernel(t_ref, p_ref, o_ref, *, g, use_cos, precision, act_dtype):
    # t_ref: (TR, g+1)  g packed time values per row plus a trailing ones col
    # p_ref: (g+3, L)   packed parameters:
    #   rows 0..g-1 : block-diagonal (lane expansion x fused linear weight)
    #   row  g      : fused bias, tiled across the g groups (consumed by the
    #                 ones column -> bias folded into the MXU matmul)
    #   row  g+1    : W * [channel == 0]  (linear-channel modulation)
    #   row  g+2    : W * [channel != 0]  (periodic-channel modulation)
    # o_ref: (TR, L)    lane-dense output, L = pad(g*E, 128)
    w_lin = p_ref[g + 1:g + 2, :]
    w_per = p_ref[g + 2:g + 3, :]
    if g > 1:
        # Expand g time values to L lanes, apply the fused linear weight and
        # add the bias in one small matmul on the otherwise-idle MXU.
        pre = jnp.dot(t_ref[...], p_ref[0:g + 1, :],
                      preferred_element_type=jnp.float32,
                      precision=precision)
    else:
        # g == 1: plain lane broadcast on the VPU, no MXU needed.
        pre = t_ref[:, 0:1] * p_ref[0:1, :] + p_ref[1:2, :]
    x = pre if act_dtype is None else pre.astype(act_dtype)
    periodic = (jnp.cos(x) if use_cos else jnp.sin(x)).astype(jnp.float32)
    # Channel 0 stays affine, channels 1..E-1 take the activation; masks are
    # already folded into W, so this is 2 muls + 1 add per element.
    # TODO(synk): a bounded-range sin/cos polynomial (skipping the generic
    # range reduction) would cut the dominant VPU cost when time is normalized.
    o_ref[...] = (pre * w_lin + periodic * w_per).astype(o_ref.dtype)


def time2vec(t, w_zero, b_zero, w_periodic, b_periodic, W, activation="sin",
             tile_rows=4096, out_dtype=jnp.float32, periodic_dtype=None,
             vmem_budget_bytes=10 * 1024 * 1024):
    """Pallas Time2Vec.

    t:           (..., 1) time values
    w_zero:      (1, 1)   Linear(1,1).weight
    b_zero:      (1,)     Linear(1,1).bias
    w_periodic:  (E-1, 1) Linear(1,E-1).weight
    b_periodic:  (E-1,)   Linear(1,E-1).bias
    W:           (E,)     modulation vector
    activation:  'sin' or 'cos'
    out_dtype:   jnp.float32 (exact) or jnp.bfloat16 (halves HBM writeback)
    periodic_dtype: optional dtype for evaluating sin/cos (e.g. jnp.bfloat16
                 on v6e/v7x where the VPU packs bf16 2x; keep None on v5e)
    returns:     (..., E)
    """
    if activation not in ("sin", "cos"):
        raise ValueError(f"activation must be 'sin' or 'cos', got {activation!r}")
    assert t.shape[-1] == 1
    E = int(W.shape[0])
    lead = t.shape[:-1]
    n = 1
    for d in lead:
        n *= int(d)

    out_dtype = jnp.dtype(out_dtype)
    out_itemsize = out_dtype.itemsize
    row_mult = _sublane_multiple(out_dtype)

    # Fuse the two in_features=1 linears into a single (E,) weight/bias pair.
    w_cat = jnp.concatenate([w_zero.reshape(1),
                             w_periodic.reshape(-1)]).astype(jnp.float32)
    b_cat = jnp.concatenate([b_zero.reshape(1),
                             b_periodic.reshape(-1)]).astype(jnp.float32)
    Wf = W.astype(jnp.float32)

    # Lane packing factor: g consecutive time steps share one output row.
    g = _choose_packing(E)
    L = g * E
    L_pad = _round_up(L, 128)

    lin_mask = (jnp.arange(E) == 0).astype(jnp.float32)
    w_lin_mod = Wf * lin_mask            # W on channel 0, zero elsewhere
    w_per_mod = Wf * (1.0 - lin_mask)    # W on channels 1..E-1, zero on 0

    # Block-diagonal (expansion x weight) matrix, bias row (fed by the ones
    # column of the lhs) and the two modulation rows.
    ew = jnp.kron(jnp.eye(g, dtype=jnp.float32), w_cat[None, :])   # (g, L)
    rows = jnp.stack([jnp.tile(b_cat, g),
                      jnp.tile(w_lin_mod, g),
                      jnp.tile(w_per_mod, g)], axis=0)             # (3, L)
    params = jnp.concatenate([ew, rows], axis=0)                   # (g+3, L)
    if L_pad != L:
        params = jnp.pad(params, ((0, 0), (0, L_pad - L)))

    # --- Tiling -----------------------------------------------------------
    # Per-row VMEM cost (double buffered): the (tr, L_pad) output block PLUS
    # the (tr, g+1) f32 input block, whose minor dim lane-pads to 128 lanes
    # (i.e. 512 B per row per buffer - as much as a 128-lane f32 output row).
    bytes_per_row = 2 * L_pad * out_itemsize + 2 * 128 * 4
    max_rows = max(row_mult,
                   (vmem_budget_bytes // bytes_per_row) // row_mult * row_mult)

    n_groups = _cdiv(max(n, 1), g)
    n_groups_pad = _round_up(n_groups, row_mult)

    tr = max(row_mult, (int(tile_rows) // row_mult) * row_mult)
    tr = min(tr, max_rows, n_groups_pad)
    steps = _cdiv(n_groups_pad, tr)
    # v7x megacore: the "parallel" axis is sharded over 2 TensorCores, so aim
    # for >= 4 steps (>= 2 pipelined steps per core) and an even step count;
    # fall back gracefully when the problem is too small.
    if n_groups_pad >= 4 * row_mult:
        steps = max(steps, 4)
    elif n_groups_pad >= 2 * row_mult:
        steps = max(steps, 2)
    if steps > 1 and steps % 2:
        steps += 1
    tr = min(max_rows,
             max(row_mult, _round_up(_cdiv(n_groups_pad, steps), row_mult)))
    steps = _cdiv(n_groups_pad, tr)
    if steps > 1 and steps % 2:
        steps += 1
    n_rows = steps * tr

    # Pack / pad the time input to (n_rows, g) and append the ones column that
    # feeds the bias row; row r holds time indices [r*g, r*g + g).
    t_flat = t.reshape(-1).astype(jnp.float32)
    pad = n_rows * g - n
    if pad:
        t_flat = jnp.pad(t_flat, (0, pad))
    t_packed = t_flat.reshape(n_rows, g)
    t_aug = jnp.concatenate(
        [t_packed, jnp.ones((n_rows, 1), jnp.float32)], axis=1)

    # Explicit scoped-VMEM limit: real footprint + headroom (covers v5e's
    # 16 MiB default, stays well inside v7x's 64 MiB physical VMEM).
    params_rows = _round_up(g + 3, 8)
    vmem_needed = (2 * tr * L_pad * out_itemsize     # output double buffer
                   + 2 * tr * 128 * 4                # input block (lane-padded)
                   + 2 * params_rows * L_pad * 4)    # resident params
    vmem_limit = int(min(max(2 * vmem_needed + (2 << 20), 24 << 20), 48 << 20))

    # HIGHEST (multi-pass decomposition) only pays off for f32 output; with a
    # bf16 output the extra passes are wasted work.
    precision = (lax.Precision.HIGHEST if out_itemsize >= 4
                 else lax.Precision.DEFAULT)

    kernel = functools.partial(_time2vec_kernel, g=g,
                               use_cos=(activation == "cos"),
                               precision=precision,
                               act_dtype=periodic_dtype)

    cost = pl.CostEstimate(
        flops=int(n_rows * L_pad * (2 * (g + 1) + 4)),
        transcendentals=int(max(n, 1) * max(E - 1, 0)),
        bytes_accessed=int(n_rows * L_pad * out_itemsize
                           + n_rows * (g + 1) * 4
                           + params_rows * L_pad * 4),
    )

    out = pl.pallas_call(
        kernel,
        out_shape=jax.ShapeDtypeStruct((n_rows, L_pad), out_dtype),
        grid_spec=pl.GridSpec(
            grid=(steps,),
            in_specs=[
                pl.BlockSpec((tr, g + 1), lambda i: (i, 0)),
                pl.BlockSpec((g + 3, L_pad), lambda i: (0, 0)),  # resident
            ],
            out_specs=pl.BlockSpec((tr, L_pad), lambda i: (i, 0)),
        ),
        compiler_params=pltpu.CompilerParams(
            dimension_semantics=("parallel",),
            vmem_limit_bytes=vmem_limit),
        cost_estimate=cost,
    )(t_aug, params)

    # Undo lane packing: (n_rows, g*E) -> (n_rows*g, E).  Slice only when the
    # kernel actually produced padding (each avoided slice saves an HBM pass).
    if L_pad != L:
        out = out[:, :L]
    out = out.reshape(n_rows * g, E)
    if n_rows * g != n:
        out = out[:n]
    return out.reshape(*lead, E)


def time2vec_reference(t, w_zero, b_zero, w_periodic, b_periodic, W,
                       activation="sin"):
    # Pure-JAX reference mirroring the PyTorch module (elementwise, exact f32).
    f0 = t * w_zero.reshape(()) + b_zero                     # (..., 1)
    pre = t * w_periodic.reshape(-1) + b_periodic            # (..., E-1)
    fr = jnp.cos(pre) if activation == "cos" else jnp.sin(pre)
    return jnp.concatenate([f0, fr], axis=-1) * W


if __name__ == "__main__":
    key = jax.random.PRNGKey(0)
    k_t, k_t2, k_w0, k_b0, k_wp, k_bp, k_W = jax.random.split(key, 7)

    batch, seq = 2, 8
    time_embed_size = 32                 # E

    # Deterministic synthetic parameters (shapes match the module __init__).
    w_zero = jax.random.normal(k_w0, (1, 1), jnp.float32)
    b_zero = jax.random.normal(k_b0, (1,), jnp.float32)
    w_periodic = jax.random.normal(k_wp, (time_embed_size - 1, 1), jnp.float32)
    b_periodic = jax.random.normal(k_bp, (time_embed_size - 1,), jnp.float32)
    W = jax.random.normal(k_W, (time_embed_size,), jnp.float32)

    # Case 1: small, single grid step, sin activation, f32 output.
    t = jax.random.uniform(k_t, (batch, seq, 1), jnp.float32)
    out = jax.block_until_ready(
        time2vec(t, w_zero, b_zero, w_periodic, b_periodic, W, "sin"))
    ref = time2vec_reference(t, w_zero, b_zero, w_periodic, b_periodic, W, "sin")
    assert out.shape == (batch, seq, time_embed_size)
    assert jnp.allclose(out, ref, atol=1e-4, rtol=1e-4)

    # Case 2: ragged size + multi-step even grid + cos activation (exercises
    # padding, lane packing and the parallel grid dimension).
    t2 = jax.random.uniform(k_t2, (3, 70, 1), jnp.float32)
    out2 = jax.block_until_ready(
        time2vec(t2, w_zero, b_zero, w_periodic, b_periodic, W, "cos",
                 tile_rows=16))
    ref2 = time2vec_reference(t2, w_zero, b_zero, w_periodic, b_periodic, W,
                              "cos")
    assert out2.shape == (3, 70, time_embed_size)
    assert jnp.allclose(out2, ref2, atol=1e-4, rtol=1e-4)

    # Case 3: bf16 output (halves HBM writeback, the dominant traffic) with a
    # correspondingly looser tolerance; tile rows snap to the bf16 16-sublane
    # multiple.
    out3 = jax.block_until_ready(
        time2vec(t, w_zero, b_zero, w_periodic, b_periodic, W, "sin",
                 out_dtype=jnp.bfloat16))
    assert out3.dtype == jnp.bfloat16
    assert jnp.allclose(out3.astype(jnp.float32), ref, atol=1e-1, rtol=1e-1)

    print("KERNEL_OK")
</pallas_src>

<mosaic_0001>
module attributes {stable_mosaic.version = 11 : i64} {
  func.func @_time2vec_kernel(%arg0: i32, %arg1: memref<8x5xf32, #tpu.memory_space<vmem>>, %arg2: memref<7x128xf32, #tpu.memory_space<vmem>>, %arg3: memref<8x128xf32, #tpu.memory_space<vmem>>) attributes {dimension_semantics = [#tpu.dimension_semantics<parallel>], iteration_bounds = array<i64: 1>, scalar_prefetch = 0 : i64, scratch_operands = 0 : i64, tpu.core_type = #tpu.core_type<tc>, window_params = [{transform_indices = @transform_0, window_bounds = array<i64: 8, 5>}, {pipeline_mode = #tpu.pipeline_mode<synchronous>, transform_indices = @transform_1, window_bounds = array<i64: 7, 128>}, {transform_indices = @transform_2, window_bounds = array<i64: 8, 128>}]} {
    %c5 = arith.constant 5 : index
    %c0 = arith.constant 0 : index
    %0 = vector.load %arg2[%c5, %c0] : memref<7x128xf32, #tpu.memory_space<vmem>>, vector<1x128xf32>
    %c6 = arith.constant 6 : index
    %c0_0 = arith.constant 0 : index
    %1 = vector.load %arg2[%c6, %c0_0] : memref<7x128xf32, #tpu.memory_space<vmem>>, vector<1x128xf32>
    %c0_1 = arith.constant 0 : index
    %c0_2 = arith.constant 0 : index
    %2 = vector.load %arg1[%c0_1, %c0_2] : memref<8x5xf32, #tpu.memory_space<vmem>>, vector<8x5xf32>
    %c0_3 = arith.constant 0 : index
    %c0_4 = arith.constant 0 : index
    %3 = vector.load %arg2[%c0_3, %c0_4] : memref<7x128xf32, #tpu.memory_space<vmem>>, vector<5x128xf32>
    %cst = arith.constant dense<0.000000e+00> : vector<8x128xf32>
    %4 = tpu.matmul %2, %3, %cst {dimension_numbers = #tpu.dot_dimension_numbers<[1], [0], [0], [1], [0, 0, 1, 1], [], []>, precision = #tpu.contract_precision<fp32>} : vector<8x5xf32>, vector<5x128xf32>, vector<8x128xf32> -> vector<8x128xf32>
    %5 = math.sin %4 : vector<8x128xf32>
    %6 = vector.broadcast %0 : vector<1x128xf32> to vector<8x128xf32>
    %7 = arith.mulf %4, %6 : vector<8x128xf32>
    %8 = vector.broadcast %1 : vector<1x128xf32> to vector<8x128xf32>
    %9 = arith.mulf %5, %8 : vector<8x128xf32>
    %10 = arith.addf %7, %9 : vector<8x128xf32>
    %c0_5 = arith.constant 0 : index
    %c0_6 = arith.constant 0 : index
    %11 = vector.load %arg3[%c0_5, %c0_6] : memref<8x128xf32, #tpu.memory_space<vmem>>, vector<8x128xf32>
    tpu.vector_store %arg3[%c0_5, %c0_6], %10 {strides = array<i32>} : memref<8x128xf32, #tpu.memory_space<vmem>>, vector<8x128xf32>,
    return
  }
  func.func @transform_0(%arg0: i32) -> (i32, i32) {
    %c0_i32 = arith.constant 0 : i32
    %c0_i32_0 = arith.constant 0 : i32
    return %arg0, %c0_i32 : i32, i32
  }
  func.func @transform_1(%arg0: i32) -> (i32, i32) {
    %c0_i32 = arith.constant 0 : i32
    %c0_i32_0 = arith.constant 0 : i32
    %c0_i32_1 = arith.constant 0 : i32
    return %c0_i32, %c0_i32_0 : i32, i32
  }
  func.func @transform_2(%arg0: i32) -> (i32, i32) {
    %c0_i32 = arith.constant 0 : i32
    %c0_i32_0 = arith.constant 0 : i32
    return %arg0, %c0_i32 : i32, i32
  }
}

</mosaic_0001>

<llo_original>
// kernel: tpu_custom_call.1
$region0: #{tpu_custom_call.1}
  #allocation0 [shape = 'u32[]', space=smem, size = 0x4, offset = 0x4, fixed_abs, tag = 'smem constant byte address 0x4 - core index']
  #allocation1 [shape = 'u32[144,128]{1,0:T(1,128)}', space=vmem, size = 0x12000, scoped, tag = 'internal scratch']
  %s0 = inlined_call_operand.hbm [shape: f32[8,5], index: 0, kind: input, shape index: {}]
  %s1 = inlined_call_operand.hbm [shape: f32[7,128], index: 1, kind: input, shape index: {}]
  %s2 = inlined_call_operand.hbm [shape: f32[8,128], index: 2, kind: output, shape index: {}]
  %s3 = sld [smem:[#allocation0]]
  $region26: #{tpu_custom_call.1} parent=0
    _
  %s5 = ssub.s32 1, %s3
  %s6 = scalar_select 0, %s5, %s3
  $region1: #{tpu_custom_call.1} parent=0
    #allocation2 [shape = 'u8[4096]{0}', space=vmem, size = 0x1000, scoped, tag = 'input window, operand 0, single buffered']
    #allocation3 [shape = 's32[1]{0}', space=sflag, size = 0x4, scoped, tag = 'scoped memory for tpu_custom_call.1']
    #allocation4 [shape = 's32[1]{0}', space=sflag, size = 0x4, scoped, tag = 'scoped memory for tpu_custom_call.1']
    #allocation5 [shape = 'u8[4096]{0}', space=vmem, size = 0x1000, scoped, tag = 'input window, operand 1, single buffered']
    #allocation6 [shape = 's32[1]{0}', space=sflag, size = 0x4, scoped, tag = 'scoped memory for tpu_custom_call.1']
    #allocation7 [shape = 'u8[4096]{0}', space=vmem, size = 0x1000, scoped, tag = 'output window, operand 0, single buffered']
    %7 = vsyncpa [#allocation3], 0
    %8 = vsyncpa [#allocation6], 0
    %9 = vsyncpa [#allocation4], 0
    // Predicated region
    $region2: #{tpu_custom_call.1} parent=1 // pred_check
      _
    $region3: #{tpu_custom_call.1} parent=1 // pred_check_branch
      %11 = sbr.rel (0) target = $region5
    $region4: #{tpu_custom_call.1} parent=1 // pred_region
      %s13 = ssub.s32 128, 128
      %14 = vsyncadd [#allocation3], %s13
      %s16 = sshll.u32 [#allocation2], 4
      %s17 = int_to_ptr.vmem [resolvable:$true] %s16
      %19 = dma.hbm_to_vmem [thread:$0]  %s0, 128, %s17, [#allocation3]
    $region5: #{tpu_custom_call.1} parent=1 // pred_fallthru
      _
    // Predicated region
    $region6: #{tpu_custom_call.1} parent=1 // pred_check
      _
    $region7: #{tpu_custom_call.1} parent=1 // pred_check_branch
      %21 = sbr.rel (0) target = $region9
    $region8: #{tpu_custom_call.1} parent=1 // pred_region
      %s23 = ssub.s32 128, 128
      %24 = vsyncadd [#allocation6], %s23
      %s26 = sshll.u32 [#allocation5], 4
      %s27 = int_to_ptr.vmem [resolvable:$true] %s26
      %29 = dma.hbm_to_vmem [thread:$0]  %s1, 128, %s27, [#allocation6]
    $region9: #{tpu_custom_call.1} parent=1 // pred_fallthru
      _
    // Predicated region
    $region10: #{tpu_custom_call.1} parent=1 // pred_check
      _
    $region11: #{tpu_custom_call.1} parent=1 // pred_check_branch
      %31 = sbr.rel (0) target = $region13
    $region12: #{tpu_custom_call.1} parent=1 // pred_region
      %32 = dma.done [#allocation3], 128
    $region13: #{tpu_custom_call.1} parent=1 // pred_fallthru
      _
    // Predicated region
    $region14: #{tpu_custom_call.1} parent=1 // pred_check
      _
    $region15: #{tpu_custom_call.1} parent=1 // pred_check_branch
      %34 = sbr.rel (0) target = $region17
    $region16: #{tpu_custom_call.1} parent=1 // pred_region
      %35 = dma.done [#allocation6], 128
    $region17: #{tpu_custom_call.1} parent=1 // pred_fallthru
      _
    %v36 = vld [vmem:[#allocation5 + $0x5] sm:$0x1]
    %v37 = vld [vmem:[#allocation5 + $0x6] sm:$0x1]
    %v38 = vld [vmem:[#allocation2] sm:$0xff]
    %v39 = vld [vmem:[#allocation5] sm:$0x1f]
    %vm40 = vcmask 39936
    %v42 = vsel %vm40, %v38, 0
    %vm44 = vcmask 1044480
    %v46 = vsel %vm44, %v39, 0
    %48 = vmatprep.subr.mxu0 0.0
    %v49 = vand.u32 %v46, 4294901760
    %50 = vmatpush1.msra.mxu0 %v49
    %51 = vmatprep.subr.mxu0 0.0
    %52 = vmatpush1.msra.mxu0 0.0
    %53 = vmatprep.subr.mxu0 0.0
    %54 = vmatpush1.msra.mxu0 0.0
    %55 = vmatprep.subr.mxu0 0.0
    %56 = vmatpush1.msra.mxu0 0.0
    %57 = vmatprep.subr.mxu0 0.0
    %58 = vmatpush1.msra.mxu0 0.0
    %59 = vmatprep.subr.mxu0 0.0
    %60 = vmatpush1.msra.mxu0 0.0
    %61 = vmatprep.subr.mxu0 0.0
    %62 = vmatpush1.msra.mxu0 0.0
    %63 = vmatprep.subr.mxu0 0.0
    %64 = vmatpush1.msra.mxu0 0.0
    %65 = vmatprep.subr.mxu0 0.0
    %66 = vmatpush1.msra.mxu0 0.0
    %67 = vmatprep.subr.mxu0 0.0
    %68 = vmatpush1.msra.mxu0 0.0
    %69 = vmatprep.subr.mxu0 0.0
    %70 = vmatpush1.msra.mxu0 0.0
    %71 = vmatprep.subr.mxu0 0.0
    %72 = vmatpush1.msra.mxu0 0.0
    %73 = vmatprep.subr.mxu0 0.0
    %74 = vmatpush1.msra.mxu0 0.0
    %75 = vmatprep.subr.mxu0 0.0
    %76 = vmatpush1.msra.mxu0 0.0
    %77 = vmatprep.subr.mxu0 0.0
    %78 = vmatpush1.msra.mxu0 0.0
    %79 = vmatprep.subr.mxu0 0.0
    %80 = vmatpush1.msra.mxu0 0.0
    %81 = vmatprep.subr.mxu0 0.0
    %82 = vmatpush1.msra.mxu0 0.0
    %83 = vmatprep.subr.mxu0 0.0
    %84 = vmatpush1.msra.mxu0 0.0
    %85 = vmatprep.subr.mxu0 0.0
    %86 = vmatpush1.msra.mxu0 0.0
    %87 = vmatprep.subr.mxu0 0.0
    %88 = vmatpush1.msra.mxu0 0.0
    %89 = vmatprep.subr.mxu0 0.0
    %90 = vmatpush1.msra.mxu0 0.0
    %91 = vmatprep.subr.mxu0 0.0
    %92 = vmatpush1.msra.mxu0 0.0
    %93 = vmatprep.subr.mxu0 0.0
    %94 = vmatpush1.msra.mxu0 0.0
    %95 = vmatprep.subr.mxu0 0.0
    %96 = vmatpush1.msra.mxu0 0.0
    %97 = vmatprep.subr.mxu0 0.0
    %98 = vmatpush1.msra.mxu0 0.0
    %99 = vmatprep.subr.mxu0 0.0
    %100 = vmatpush1.msra.mxu0 0.0
    %101 = vmatprep.subr.mxu0 0.0
    %102 = vmatpush1.msra.mxu0 0.0
    %103 = vmatprep.subr.mxu0 0.0
    %104 = vmatpush1.msra.mxu0 0.0
    %105 = vmatprep.subr.mxu0 0.0
    %106 = vmatpush1.msra.mxu0 0.0
    %107 = vmatprep.subr.mxu0 0.0
    %108 = vmatpush1.msra.mxu0 0.0
    %109 = vmatprep.subr.mxu0 0.0
    %110 = vmatpush1.msra.mxu0 0.0
    %111 = vmatprep.subr.mxu0 0.0
    %112 = vmatpush1.msra.mxu0 0.0
    %113 = vmatprep.mubr.f32.mxu0 0.0
    %v114 = vand.u32 %v42, 4294901760
    %v115 = vsub.f32 %v42, %v114
    %v116 = vand.u32 %v115, 4294901760
    %v117 = vsub.f32 %v115, %v116
    %v118 = vand.u32 %v117, 4294901760
    %119 = vmatmul.mubr.f32.gmra.mrb[0].mxu0 %v118
    %v120 = vpop.f32.mrb[0].mxu0
    %v121 = vadd.f32 0.0, %v120
    %v122 = vpop.f32.mrb[0].mxu0
    %123 = vdwg.mxu0
    %124 = vmatprep.subr.mxu0 0.0
    %v125 = vand.u32 %v46, 4294901760
    %v126 = vsub.f32 %v46, %v125
    %v127 = vand.u32 %v126, 4294901760
    %v128 = vsub.f32 %v126, %v127
    %v129 = vand.u32 %v128, 4294901760
    %130 = vmatpush1.msra.mxu0 %v129
    %131 = vmatprep.subr.mxu0 0.0
    %132 = vmatpush1.msra.mxu0 0.0
    %133 = vmatprep.subr.mxu0 0.0
    %134 = vmatpush1.msra.mxu0 0.0
    %135 = vmatprep.subr.mxu0 0.0
    %136 = vmatpush1.msra.mxu0 0.0
    %137 = vmatprep.subr.mxu0 0.0
    %138 = vmatpush1.msra.mxu0 0.0
    %139 = vmatprep.subr.mxu0 0.0
    %140 = vmatpush1.msra.mxu0 0.0
    %141 = vmatprep.subr.mxu0 0.0
    %142 = vmatpush1.msra.mxu0 0.0
    %143 = vmatprep.subr.mxu0 0.0
    %144 = vmatpush1.msra.mxu0 0.0
    %145 = vmatprep.subr.mxu0 0.0
    %146 = vmatpush1.msra.mxu0 0.0
    %147 = vmatprep.subr.mxu0 0.0
    %148 = vmatpush1.msra.mxu0 0.0
    %149 = vmatprep.subr.mxu0 0.0
    %150 = vmatpush1.msra.mxu0 0.0
    %151 = vmatprep.subr.mxu0 0.0
    %152 = vmatpush1.msra.mxu0 0.0
    %153 = vmatprep.subr.mxu0 0.0
    %154 = vmatpush1.msra.mxu0 0.0
    %155 = vmatprep.subr.mxu0 0.0
    %156 = vmatpush1.msra.mxu0 0.0
    %157 = vmatprep.subr.mxu0 0.0
    %158 = vmatpush1.msra.mxu0 0.0
    %159 = vmatprep.subr.mxu0 0.0
    %160 = vmatpush1.msra.mxu0 0.0
    %161 = vmatprep.subr.mxu0 0.0
    %162 = vmatpush1.msra.mxu0 0.0
    %163 = vmatprep.subr.mxu0 0.0
    %164 = vmatpush1.msra.mxu0 0.0
    %165 = vmatprep.subr.mxu0 0.0
    %166 = vmatpush1.msra.mxu0 0.0
    %167 = vmatprep.subr.mxu0 0.0
    %168 = vmatpush1.msra.mxu0 0.0
    %169 = vmatprep.subr.mxu0 0.0
    %170 = vmatpush1.msra.mxu0 0.0
    %171 = vmatprep.subr.mxu0 0.0
    %172 = vmatpush1.msra.mxu0 0.0
    %173 = vmatprep.subr.mxu0 0.0
    %174 = vmatpush1.msra.mxu0 0.0
    %175 = vmatprep.subr.mxu0 0.0
    %176 = vmatpush1.msra.mxu0 0.0
    %177 = vmatprep.subr.mxu0 0.0
    %178 = vmatpush1.msra.mxu0 0.0
    %179 = vmatprep.subr.mxu0 0.0
    %180 = vmatpush1.msra.mxu0 0.0
    %181 = vmatprep.subr.mxu0 0.0
    %182 = vmatpush1.msra.mxu0 0.0
    %183 = vmatprep.subr.mxu0 0.0
    %184 = vmatpush1.msra.mxu0 0.0
    %185 = vmatprep.subr.mxu0 0.0
    %186 = vmatpush1.msra.mxu0 0.0
    %187 = vmatprep.subr.mxu0 0.0
    %188 = vmatpush1.msra.mxu0 0.0
    %189 = vmatprep.subr.mxu0 0.0
    %190 = vmatpush1.msra.mxu0 0.0
    %191 = vmatprep.subr.mxu0 0.0
    %192 = vmatpush1.msra.mxu0 0.0
    %193 = vmatprep.mubr.f32.mxu0 0.0
    %v194 = vand.u32 %v42, 4294901760
    %195 = vmatmul.mubr.f32.gmra.mrb[0].mxu0 %v194
    %v196 = vpop.f32.mrb[0].mxu0
    %v197 = vadd.f32 %v121, %v196
    %v198 = vpop.f32.mrb[0].mxu0
    %199 = vdwg.mxu0
    %200 = vmatprep.subr.mxu0 0.0
    %v201 = vand.u32 %v46, 4294901760
    %v202 = vsub.f32 %v46, %v201
    %203 = vmatpush1.msra.mxu0 %v202
    %204 = vmatprep.subr.mxu0 0.0
    %205 = vmatpush1.msra.mxu0 0.0
    %206 = vmatprep.subr.mxu0 0.0
    %207 = vmatpush1.msra.mxu0 0.0
    %208 = vmatprep.subr.mxu0 0.0
    %209 = vmatpush1.msra.mxu0 0.0
    %210 = vmatprep.subr.mxu0 0.0
    %211 = vmatpush1.msra.mxu0 0.0
    %212 = vmatprep.subr.mxu0 0.0
    %213 = vmatpush1.msra.mxu0 0.0
    %214 = vmatprep.subr.mxu0 0.0
    %215 = vmatpush1.msra.mxu0 0.0
    %216 = vmatprep.subr.mxu0 0.0
    %217 = vmatpush1.msra.mxu0 0.0
    %218 = vmatprep.subr.mxu0 0.0
    %219 = vmatpush1.msra.mxu0 0.0
    %220 = vmatprep.subr.mxu0 0.0
    %221 = vmatpush1.msra.mxu0 0.0
    %222 = vmatprep.subr.mxu0 0.0
    %223 = vmatpush1.msra.mxu0 0.0
    %224 = vmatprep.subr.mxu0 0.0
    %225 = vmatpush1.msra.mxu0 0.0
    %226 = vmatprep.subr.mxu0 0.0
    %227 = vmatpush1.msra.mxu0 0.0
    %228 = vmatprep.subr.mxu0 0.0
    %229 = vmatpush1.msra.mxu0 0.0
    %230 = vmatprep.subr.mxu0 0.0
    %231 = vmatpush1.msra.mxu0 0.0
    %232 = vmatprep.subr.mxu0 0.0
    %233 = vmatpush1.msra.mxu0 0.0
    %234 = vmatprep.subr.mxu0 0.0
    %235 = vmatpush1.msra.mxu0 0.0
    %236 = vmatprep.subr.mxu0 0.0
    %237 = vmatpush1.msra.mxu0 0.0
    %238 = vmatprep.subr.mxu0 0.0
    %239 = vmatpush1.msra.mxu0 0.0
    %240 = vmatprep.subr.mxu0 0.0
    %241 = vmatpush1.msra.mxu0 0.0
    %242 = vmatprep.subr.mxu0 0.0
    %243 = vmatpush1.msra.mxu0 0.0
    %244 = vmatprep.subr.mxu0 0.0
    %245 = vmatpush1.msra.mxu0 0.0
    %246 = vmatprep.subr.mxu0 0.0
    %247 = vmatpush1.msra.mxu0 0.0
    %248 = vmatprep.subr.mxu0 0.0
    %249 = vmatpush1.msra.mxu0 0.0
    %250 = vmatprep.subr.mxu0 0.0
    %251 = vmatpush1.msra.mxu0 0.0
    %252 = vmatprep.subr.mxu0 0.0
    %253 = vmatpush1.msra.mxu0 0.0
    %254 = vmatprep.subr.mxu0 0.0
    %255 = vmatpush1.msra.mxu0 0.0
    %256 = vmatprep.subr.mxu0 0.0
    %257 = vmatpush1.msra.mxu0 0.0
    %258 = vmatprep.subr.mxu0 0.0
    %259 = vmatpush1.msra.mxu0 0.0
    %260 = vmatprep.subr.mxu0 0.0
    %261 = vmatpush1.msra.mxu0 0.0
    %262 = vmatprep.subr.mxu0 0.0
    %263 = vmatpush1.msra.mxu0 0.0
    %264 = vmatprep.subr.mxu0 0.0
    %265 = vmatpush1.msra.mxu0 0.0
    %266 = vmatprep.mubr.f32.mxu0 0.0
    %v267 = vand.u32 %v42, 4294901760
    %v268 = vsub.f32 %v42, %v267
    %269 = vmatmul.mubr.f32.gmra.mrb[0].mxu0 %v268
    %v270 = vpop.f32.mrb[0].mxu0
    %v271 = vadd.f32 %v197, %v270
    %v272 = vpop.f32.mrb[0].mxu0
    %273 = vdwg.mxu0
    %274 = vmatprep.subr.mxu0 0.0
    %v275 = vand.u32 %v46, 4294901760
    %276 = vmatpush1.msra.mxu0 %v275
    %277 = vmatprep.subr.mxu0 0.0
    %278 = vmatpush1.msra.mxu0 0.0
    %279 = vmatprep.subr.mxu0 0.0
    %280 = vmatpush1.msra.mxu0 0.0
    %281 = vmatprep.subr.mxu0 0.0
    %282 = vmatpush1.msra.mxu0 0.0
    %283 = vmatprep.subr.mxu0 0.0
    %284 = vmatpush1.msra.mxu0 0.0
    %285 = vmatprep.subr.mxu0 0.0
    %286 = vmatpush1.msra.mxu0 0.0
    %287 = vmatprep.subr.mxu0 0.0
    %288 = vmatpush1.msra.mxu0 0.0
    %289 = vmatprep.subr.mxu0 0.0
    %290 = vmatpush1.msra.mxu0 0.0
    %291 = vmatprep.subr.mxu0 0.0
    %292 = vmatpush1.msra.mxu0 0.0
    %293 = vmatprep.subr.mxu0 0.0
    %294 = vmatpush1.msra.mxu0 0.0
    %295 = vmatprep.subr.mxu0 0.0
    %296 = vmatpush1.msra.mxu0 0.0
    %297 = vmatprep.subr.mxu0 0.0
    %298 = vmatpush1.msra.mxu0 0.0
    %299 = vmatprep.subr.mxu0 0.0
    %300 = vmatpush1.msra.mxu0 0.0
    %301 = vmatprep.subr.mxu0 0.0
    %302 = vmatpush1.msra.mxu0 0.0
    %303 = vmatprep.subr.mxu0 0.0
    %304 = vmatpush1.msra.mxu0 0.0
    %305 = vmatprep.subr.mxu0 0.0
    %306 = vmatpush1.msra.mxu0 0.0
    %307 = vmatprep.subr.mxu0 0.0
    %308 = vmatpush1.msra.mxu0 0.0
    %309 = vmatprep.subr.mxu0 0.0
    %310 = vmatpush1.msra.mxu0 0.0
    %311 = vmatprep.subr.mxu0 0.0
    %312 = vmatpush1.msra.mxu0 0.0
    %313 = vmatprep.subr.mxu0 0.0
    %314 = vmatpush1.msra.mxu0 0.0
    %315 = vmatprep.subr.mxu0 0.0
    %316 = vmatpush1.msra.mxu0 0.0
    %317 = vmatprep.subr.mxu0 0.0
    %318 = vmatpush1.msra.mxu0 0.0
    %319 = vmatprep.subr.mxu0 0.0
    %320 = vmatpush1.msra.mxu0 0.0
    %321 = vmatprep.subr.mxu0 0.0
    %322 = vmatpush1.msra.mxu0 0.0
    %323 = vmatprep.subr.mxu0 0.0
    %324 = vmatpush1.msra.mxu0 0.0
    %325 = vmatprep.subr.mxu0 0.0
    %326 = vmatpush1.msra.mxu0 0.0
    %327 = vmatprep.subr.mxu0 0.0
    %328 = vmatpush1.msra.mxu0 0.0
    %329 = vmatprep.subr.mxu0 0.0
    %330 = vmatpush1.msra.mxu0 0.0
    %331 = vmatprep.subr.mxu0 0.0
    %332 = vmatpush1.msra.mxu0 0.0
    %333 = vmatprep.subr.mxu0 0.0
    %334 = vmatpush1.msra.mxu0 0.0
    %335 = vmatprep.subr.mxu0 0.0
    %336 = vmatpush1.msra.mxu0 0.0
    %337 = vmatprep.subr.mxu0 0.0
    %338 = vmatpush1.msra.mxu0 0.0
    %339 = vmatprep.mubr.f32.mxu0 0.0
    %v340 = vand.u32 %v42, 4294901760
    %v341 = vsub.f32 %v42, %v340
    %v342 = vand.u32 %v341, 4294901760
    %343 = vmatmul.mubr.f32.gmra.mrb[0].mxu0 %v342
    %v344 = vpop.f32.mrb[0].mxu0
    %v345 = vadd.f32 %v271, %v344
    %v346 = vpop.f32.mrb[0].mxu0
    %347 = vdwg.mxu0
    %348 = vmatprep.subr.mxu0 0.0
    %v349 = vand.u32 %v46, 4294901760
    %v350 = vsub.f32 %v46, %v349
    %v351 = vand.u32 %v350, 4294901760
    %352 = vmatpush1.msra.mxu0 %v351
    %353 = vmatprep.subr.mxu0 0.0
    %354 = vmatpush1.msra.mxu0 0.0
    %355 = vmatprep.subr.mxu0 0.0
    %356 = vmatpush1.msra.mxu0 0.0
    %357 = vmatprep.subr.mxu0 0.0
    %358 = vmatpush1.msra.mxu0 0.0
    %359 = vmatprep.subr.mxu0 0.0
    %360 = vmatpush1.msra.mxu0 0.0
    %361 = vmatprep.subr.mxu0 0.0
    %362 = vmatpush1.msra.mxu0 0.0
    %363 = vmatprep.subr.mxu0 0.0
    %364 = vmatpush1.msra.mxu0 0.0
    %365 = vmatprep.subr.mxu0 0.0
    %366 = vmatpush1.msra.mxu0 0.0
    %367 = vmatprep.subr.mxu0 0.0
    %368 = vmatpush1.msra.mxu0 0.0
    %369 = vmatprep.subr.mxu0 0.0
    %370 = vmatpush1.msra.mxu0 0.0
    %371 = vmatprep.subr.mxu0 0.0
    %372 = vmatpush1.msra.mxu0 0.0
    %373 = vmatprep.subr.mxu0 0.0
    %374 = vmatpush1.msra.mxu0 0.0
    %375 = vmatprep.subr.mxu0 0.0
    %376 = vmatpush1.msra.mxu0 0.0
    %377 = vmatprep.subr.mxu0 0.0
    %378 = vmatpush1.msra.mxu0 0.0
    %379 = vmatprep.subr.mxu0 0.0
    %380 = vmatpush1.msra.mxu0 0.0
    %381 = vmatprep.subr.mxu0 0.0
    %382 = vmatpush1.msra.mxu0 0.0
    %383 = vmatprep.subr.mxu0 0.0
    %384 = vmatpush1.msra.mxu0 0.0
    %385 = vmatprep.subr.mxu0 0.0
    %386 = vmatpush1.msra.mxu0 0.0
    %387 = vmatprep.subr.mxu0 0.0
    %388 = vmatpush1.msra.mxu0 0.0
    %389 = vmatprep.subr.mxu0 0.0
    %390 = vmatpush1.msra.mxu0 0.0
    %391 = vmatprep.subr.mxu0 0.0
    %392 = vmatpush1.msra.mxu0 0.0
    %393 = vmatprep.subr.mxu0 0.0
    %394 = vmatpush1.msra.mxu0 0.0
    %395 = vmatprep.subr.mxu0 0.0
    %396 = vmatpush1.msra.mxu0 0.0
    %397 = vmatprep.subr.mxu0 0.0
    %398 = vmatpush1.msra.mxu0 0.0
    %399 = vmatprep.subr.mxu0 0.0
    %400 = vmatpush1.msra.mxu0 0.0
    %401 = vmatprep.subr.mxu0 0.0
    %402 = vmatpush1.msra.mxu0 0.0
    %403 = vmatprep.subr.mxu0 0.0
    %404 = vmatpush1.msra.mxu0 0.0
    %405 = vmatprep.subr.mxu0 0.0
    %406 = vmatpush1.msra.mxu0 0.0
    %407 = vmatprep.subr.mxu0 0.0
    %408 = vmatpush1.msra.mxu0 0.0
    %409 = vmatprep.subr.mxu0 0.0
    %410 = vmatpush1.msra.mxu0 0.0
    %411 = vmatprep.subr.mxu0 0.0
    %412 = vmatpush1.msra.mxu0 0.0
    %413 = vmatprep.subr.mxu0 0.0
    %414 = vmatpush1.msra.mxu0 0.0
    %415 = vmatprep.mubr.f32.mxu0 0.0
    %v416 = vand.u32 %v42, 4294901760
    %417 = vmatmul.mubr.f32.gmra.mrb[0].mxu0 %v416
    %v418 = vpop.f32.mrb[0].mxu0
    %v419 = vadd.f32 %v345, %v418
    %v420 = vpop.f32.mrb[0].mxu0
    %421 = vdwg.mxu0
    %422 = vmatprep.subr.mxu0 0.0
    %v423 = vand.u32 %v46, 4294901760
    %424 = vmatpush1.msra.mxu0 %v423
    %425 = vmatprep.subr.mxu0 0.0
    %426 = vmatpush1.msra.mxu0 0.0
    %427 = vmatprep.subr.mxu0 0.0
    %428 = vmatpush1.msra.mxu0 0.0
    %429 = vmatprep.subr.mxu0 0.0
    %430 = vmatpush1.msra.mxu0 0.0
    %431 = vmatprep.subr.mxu0 0.0
    %432 = vmatpush1.msra.mxu0 0.0
    %433 = vmatprep.subr.mxu0 0.0
    %434 = vmatpush1.msra.mxu0 0.0
    %435 = vmatprep.subr.mxu0 0.0
    %436 = vmatpush1.msra.mxu0 0.0
    %437 = vmatprep.subr.mxu0 0.0
    %438 = vmatpush1.msra.mxu0 0.0
    %439 = vmatprep.subr.mxu0 0.0
    %440 = vmatpush1.msra.mxu0 0.0
    %441 = vmatprep.subr.mxu0 0.0
    %442 = vmatpush1.msra.mxu0 0.0
    %443 = vmatprep.subr.mxu0 0.0
    %444 = vmatpush1.msra.mxu0 0.0
    %445 = vmatprep.subr.mxu0 0.0
    %446 = vmatpush1.msra.mxu0 0.0
    %447 = vmatprep.subr.mxu0 0.0
    %448 = vmatpush1.msra.mxu0 0.0
    %449 = vmatprep.subr.mxu0 0.0
    %450 = vmatpush1.msra.mxu0 0.0
    %451 = vmatprep.subr.mxu0 0.0
    %452 = vmatpush1.msra.mxu0 0.0
    %453 = vmatprep.subr.mxu0 0.0
    %454 = vmatpush1.msra.mxu0 0.0
    %455 = vmatprep.subr.mxu0 0.0
    %456 = vmatpush1.msra.mxu0 0.0
    %457 = vmatprep.subr.mxu0 0.0
    %458 = vmatpush1.msra.mxu0 0.0
    %459 = vmatprep.subr.mxu0 0.0
    %460 = vmatpush1.msra.mxu0 0.0
    %461 = vmatprep.subr.mxu0 0.0
    %462 = vmatpush1.msra.mxu0 0.0
    %463 = vmatprep.subr.mxu0 0.0
    %464 = vmatpush1.msra.mxu0 0.0
    %465 = vmatprep.subr.mxu0 0.0
    %466 = vmatpush1.msra.mxu0 0.0
    %467 = vmatprep.subr.mxu0 0.0
    %468 = vmatpush1.msra.mxu0 0.0
    %469 = vmatprep.subr.mxu0 0.0
    %470 = vmatpush1.msra.mxu0 0.0
    %471 = vmatprep.subr.mxu0 0.0
    %472 = vmatpush1.msra.mxu0 0.0
    %473 = vmatprep.subr.mxu0 0.0
    %474 = vmatpush1.msra.mxu0 0.0
    %475 = vmatprep.subr.mxu0 0.0
    %476 = vmatpush1.msra.mxu0 0.0
    %477 = vmatprep.subr.mxu0 0.0
    %478 = vmatpush1.msra.mxu0 0.0
    %479 = vmatprep.subr.mxu0 0.0
    %480 = vmatpush1.msra.mxu0 0.0
    %481 = vmatprep.subr.mxu0 0.0
    %482 = vmatpush1.msra.mxu0 0.0
    %483 = vmatprep.subr.mxu0 0.0
    %484 = vmatpush1.msra.mxu0 0.0
    %485 = vmatprep.subr.mxu0 0.0
    %486 = vmatpush1.msra.mxu0 0.0
    %487 = vmatprep.mubr.f32.mxu0 0.0
    %v488 = vand.u32 %v42, 4294901760
    %489 = vmatmul.mubr.f32.gmra.mrb[0].mxu0 %v488
    %v490 = vpop.f32.mrb[0].mxu0
    %v491 = vadd.f32 %v419, %v490
    %v492 = vpop.f32.mrb[0].mxu0
    %493 = vdwg.mxu0
    %v494 = vand.u32 2147483647, %v491
    %vm495 = vcmp.le.f32.partialorder %v494, 0.7853982
    %vm496 = vcmp.lt.s32.totalorder %v491, 0
    %v497 = vand.u32 %v491, 2139095040
    %v498 = vshrl.u32 %v497, 23
    %v499 = vsub.s32 %v498, 127
    %v500 = vand.u32 2147483647, %v491
    %v501 = vand.u32 %v500, 8388607
    %v502 = vor.u32 %v501, 8388608
    %v503 = vsub.s32 0, %v502
    %v504 = vadd.s32 %v499, 1
    %vm505 = vcmp.gt.s32.totalorder %v504, 0
    %v506 = vsel %vm505, %v504, 0
    %v507 = vshrl.u32 %v506, 5
    %v508 = vand.u32 %v506, 31
    %v509 = vsub.s32 32, %v508
    %v510 = vshrl.u32 683565275, %v509
    %v511 = vshll.u32 683565275, %v508
    %v512 = vshrl.u32 2475754826, %v509
    %v513 = vor.u32 %v511, %v512
    %v514 = vshll.u32 2475754826, %v508
    %v515 = vshrl.u32 2131351028, %v509
    %v516 = vor.u32 %v514, %v515
    %v517 = vshll.u32 2131351028, %v508
    %v518 = vshrl.u32 2102212464, %v509
    %v519 = vor.u32 %v517, %v518
    %v520 = vshll.u32 2102212464, %v508
    %v521 = vshrl.u32 920167782, %v509
    %v522 = vor.u32 %v520, %v521
    %v523 = vshll.u32 920167782, %v508
    %v524 = vshrl.u32 1326507024, %v509
    %v525 = vor.u32 %v523, %v524
    %vm526 = vcmp.lt.s32.totalorder %v507, 1
    %vm527 = vcmp.lt.s32.totalorder %v507, 2
    %vm528 = vcmp.lt.s32.totalorder %v507, 3
    %vm529 = vcmp.lt.s32.totalorder %v507, 4
    %v530 = vsel %vm526, %v510, %v513
    %v531 = vsel %vm529, %v519, 2102212464
    %v532 = vsel %vm528, %v516, %v531
    %v533 = vsel %vm527, %v530, %v532
    %v534 = vsel %vm526, %v513, %v516
    %v535 = vsel %vm529, %v522, 920167782
    %v536 = vsel %vm528, %v519, %v535
    %v537 = vsel %vm527, %v534, %v536
    %v538 = vsel %vm526, %v516, %v519
    %v539 = vsel %vm529, %v525, 1326507024
    %v540 = vsel %vm528, %v522, %v539
    %v541 = vsel %vm527, %v538, %v540
    %v542 = vshll.u32 %v502, 8
    %v543 = vmul.u32.u64.compose %v542, %v541
    %v544 = vextract.low.u32 %v543
    %v545 = vextract.high.u32 %v543
    %v546 = vmul.u32.u64.compose %v542, %v537
    %v547 = vextract.low.u32 %v546
    %v548 = vextract.high.u32 %v546
    %v549 = vmul.u32 %v542, %v533
    %v550 = vadd.s32 %v545, %v547
    %vm551 = vc.u32 %v545, %v547
    %v552 = vadd.s32 %v548, 1
    %v553 = vsel %vm551, %v552, %v548
    %v554 = vadd.s32 %v549, %v553
    %v555 = vadd.s32 %v554, 536870912
    %v556 = vshrl.u32 %v555, 30
    %v557 = vshll.u32 %v556, 30
    %v558 = vsub.s32 %v554, %v557
    %vm559 = vcmp.lt.s32.totalorder %v558, 0
    %v560 = vsub.s32 0, %v558
    %v561 = vsel %vm559, %v560, %v558
    %v562 = vclz %v561
    %v563 = vsub.s32 %v562, 2
    %vm564 = vcmp.gt.s32.totalorder 0, %v563
    %v565 = vsel %vm564, 0, %v563
    %v566 = vsub.s32 32, %v565
    %v567 = vshll.u32 %v558, %v565
    %v568 = vshrl.u32 %v550, %v566
    %v569 = vor.u32 %v567, %v568
    %v570 = vsub.s32 4294967266, %v565
    %v571 = vadd.s32 %v570, 127
    %v572 = vshll.u32 %v571, 23
    %v573 = vor.u32 4788187, %v572
    %v574 = vand.u32 2147483647, %v573
    %v576 = vcvt.s32.f32 %v569
    %v577 = vmul.f32 %v576, %v574
    %v578 = vxor.u32 %v577, 2147483648
    %v579 = vsel %vm496, %v578, %v577
    %v580 = vsub.s32 4, %v556
    %v581 = vsel %vm496, %v580, %v556
    %v582 = vsel %vm495, %v491, %v579
    %v583 = vsel %vm495, 0, %v581
    %v584 = vcosq.f32.pop %v582
    %v585 = vsinq.f32.pop %v582
    %vm586 = vweird.f32 %v491
    %v587 = vadd.s32 %v583, 3
    %v588 = vand.u32 %v587, 3
    %vm589 = vcmp.lt.s32.totalorder %v588, 2
    %vm590 = vcmp.eq.s32.totalorder %v588, 0
    %v591 = vxor.u32 %v585, 2147483648
    %v592 = vsel %vm590, %v584, %v591
    %vm593 = vcmp.eq.s32.totalorder %v588, 2
    %v594 = vxor.u32 %v584, 2147483648
    %v595 = vsel %vm593, %v594, %v585
    %v596 = vsel %vm589, %v592, %v595
    %v597 = vsel %vm586, nan, %v596
    %v598 = vlaneseq
    %v599 = vshrl.u32 %v598, 7
    %v600 = vsub.s32 0, %v599
    %v601 = vrot.slane %v36, %v600
    %v602 = vmul.f32 %v491, %v601
    %v603 = vlaneseq
    %v604 = vshrl.u32 %v603, 7
    %v605 = vsub.s32 0, %v604
    %v606 = vrot.slane %v37, %v605
    %v607 = vmul.f32 %v597, %v606
    %v608 = vadd.f32 %v602, %v607
    %609 = vst [vmem:[#allocation7] sm:$0xff] %v608
    // Predicated region
    $region18: #{tpu_custom_call.1} parent=1 // pred_check
      _
    $region19: #{tpu_custom_call.1} parent=1 // pred_check_branch
      %611 = sbr.rel (0) target = $region21
    $region20: #{tpu_custom_call.1} parent=1 // pred_region
      %s613 = ssub.s32 128, 128
      %614 = vsyncadd [#allocation4], %s613
      %s616 = sshll.u32 [#allocation7], 4
      %s617 = int_to_ptr.vmem [resolvable:$true] %s616
      %619 = dma.vmem_to_hbm [thread:$0]  %s617, 128, %s2, [#allocation4]
    $region21: #{tpu_custom_call.1} parent=1 // pred_fallthru
      _
    // Predicated region
    $region22: #{tpu_custom_call.1} parent=1 // pred_check
      _
    $region23: #{tpu_custom_call.1} parent=1 // pred_check_branch
      %621 = sbr.rel (0) target = $region25
    $region24: #{tpu_custom_call.1} parent=1 // pred_region
      %622 = dma.done [#allocation4], 128
    $region25: #{tpu_custom_call.1} parent=1 // pred_fallthru
      _
    %623 = vsyncpa [#allocation3], 1
    %624 = vsyncpa [#allocation6], 1
    %625 = vsyncpa [#allocation4], 1

</llo_original>
